<compile_context>
chip_gen: v7x
topology: tpu7x:2x2x1
jax: 0.10.0
libtpu: 0.0.40
codegen_flags: <defaults>
</compile_context>

<pallas_src>
import jax
import jax.numpy as jnp
from jax.experimental import pallas as pl
from jax.experimental.pallas import tpu as pltpu

NCE_T = 15.0


def _cvc_loss_kernel(pred_ref, orig_ref, out_ref):
    """Per-batch-element CVC loss.

    pred_ref / orig_ref: (D, L) = (melbin_no, lin_dim) block in the *native*
    input layout (melbin on the sublane axis, lin_dim on the lane axis).
    out_ref: (1, 1) per-sample cross-entropy loss (target class 0).
    """
    # Cast once right after load; the DMA stays in the caller's dtype.
    p = pred_ref[...].astype(jnp.float32)
    o = orig_ref[...].astype(jnp.float32)
    D, L = p.shape

    # L2-normalize each length-D column (== the rows of the permuted (L, D)
    # view in the PyTorch reference).  rsqrt -> EUP slot, not a VALU divide.
    # (Matches torch norm-then-divide exactly: no epsilon, zero rows -> inf/nan.)
    p_n = p * jax.lax.rsqrt(jnp.sum(p * p, axis=0, keepdims=True))
    o_n = o * jax.lax.rsqrt(jnp.sum(o * o, axis=0, keepdims=True))

    # One explicit in-VMEM transpose (XLU), reused by both Gram matmuls (MXU).
    p_t = jnp.transpose(p_n)                                        # (L, D)
    s1 = jnp.dot(p_t, o_n, preferred_element_type=jnp.float32)      # (L, L)
    s2 = jnp.dot(p_t, p_n, preferred_element_type=jnp.float32)      # (L, L)

    inv_t = jnp.float32(1.0 / NCE_T)
    neg_fill = jnp.float32(-10.0)

    # Single 2D diagonal mask (the reference's eye(lin_dim), used for BOTH
    # similarity matrices, exactly as in the PyTorch code).
    row = jax.lax.broadcasted_iota(jnp.int32, (L, L), 0)
    col = jax.lax.broadcasted_iota(jnp.int32, (L, L), 1)
    diag = row == col

    def _sum11(x):   # (L, L) -> (1, 1): lane reduce then sublane reduce
        return jnp.sum(jnp.sum(x, axis=1, keepdims=True), axis=0, keepdims=True)

    def _max11(x):
        return jnp.max(jnp.max(x, axis=1, keepdims=True), axis=0, keepdims=True)

    # l_pos = <flatten(p_n), flatten(o_n)> = trace(s1), taken before masking.
    z_pos = _sum11(jnp.where(diag, s1, jnp.float32(0.0))) * inv_t   # (1, 1)

    # masked_fill_(diag, -10.0), then / T ; logits = [z_pos, z1.flat, z2.flat].
    z1 = jnp.where(diag, neg_fill, s1) * inv_t                      # (L, L)
    z2 = jnp.where(diag, neg_fill, s2) * inv_t                      # (L, L)

    # CrossEntropyLoss(target=0, reduction='none') = logsumexp(logits) - z_pos.
    # Fuse the two (L, L) tiles: one elementwise max + single max-reduce, and
    # one elementwise add of the exp tiles + single sum-reduce.
    m = jnp.maximum(_max11(jnp.maximum(z1, z2)), z_pos)             # (1, 1)
    sum_exp = (jnp.exp(z_pos - m)
               + _sum11(jnp.exp(z1 - m) + jnp.exp(z2 - m)))
    lse = m + jnp.log(sum_exp)
    out_ref[...] = lse - z_pos


def cvc_loss(wav_pred, wav_orig):
    """Pallas implementation of CVCLoss.forward; returns a scalar float32."""
    B, melbin_no, lin_dim = wav_orig.shape
    D, L = melbin_no, lin_dim
    # The reference's `.view(batch, dim, -1)`; the permute(0, 2, 1) is absorbed
    # into the kernel, so no extra HBM transpose pass is issued here.
    pred = jnp.reshape(wav_pred, (B, D, L))
    orig = jnp.reshape(wav_orig, (B, D, L))

    flops = B * (4 * D * L * L + 8 * L * L + 8 * D * L)
    transcendentals = B * (2 * L * L + 2 * L + 4)
    bytes_accessed = int(pred.size * pred.dtype.itemsize
                         + orig.size * orig.dtype.itemsize + B * 4)

    per_sample = pl.pallas_call(
        _cvc_loss_kernel,
        out_shape=jax.ShapeDtypeStruct((B, 1, 1), jnp.float32),
        grid=(B,),
        in_specs=[
            pl.BlockSpec((None, D, L), lambda b: (b, 0, 0)),
            pl.BlockSpec((None, D, L), lambda b: (b, 0, 0)),
        ],
        out_specs=pl.BlockSpec((None, 1, 1), lambda b: (b, 0, 0)),
        compiler_params=pltpu.CompilerParams(
            dimension_semantics=("parallel",)),
        cost_estimate=pl.CostEstimate(
            flops=flops, transcendentals=transcendentals,
            bytes_accessed=bytes_accessed),
    )(pred, orig)
    # reduction='none' cross-entropy, then .mean() over the batch.
    return jnp.mean(per_sample)


def _cvc_loss_ref(wav_pred, wav_orig):
    """Pure-JAX reference mirroring the PyTorch forward, for validation."""
    B, melbin_no, lin_dim = wav_orig.shape
    dim = melbin_no
    p = jnp.reshape(wav_pred, (B, dim, -1)).transpose(0, 2, 1).astype(jnp.float32)
    o = jnp.reshape(wav_orig, (B, dim, -1)).transpose(0, 2, 1).astype(jnp.float32)
    p = p / jnp.linalg.norm(p, axis=2, keepdims=True)
    o = o / jnp.linalg.norm(o, axis=2, keepdims=True)
    l_pos = jnp.einsum('blk,blk->b', p, o)[:, None]                 # (B, 1)
    s1 = jnp.einsum('bld,bmd->blm', p, o)
    s2 = jnp.einsum('bld,bmd->blm', p, p)
    eye = jnp.eye(lin_dim, dtype=bool)[None]
    s1 = jnp.where(eye, -10.0, s1).reshape(B, -1)
    s2 = jnp.where(eye, -10.0, s2).reshape(B, -1)
    out = jnp.concatenate([l_pos, s1, s2], axis=1) / NCE_T
    loss = jax.scipy.special.logsumexp(out, axis=1) - out[:, 0]
    return jnp.mean(loss)


if __name__ == "__main__":
    key = jax.random.PRNGKey(0)
    k1, k2 = jax.random.split(key)
    # wav_orig: (batch, melbin_no, lin_dim); lane-aligned sizes keep vregs dense.
    B, melbin_no, lin_dim = 2, 128, 128
    wav_pred = jax.random.normal(k1, (B, melbin_no, lin_dim), dtype=jnp.float32)
    wav_orig = jax.random.normal(k2, (B, melbin_no, lin_dim), dtype=jnp.float32)

    loss = jax.jit(cvc_loss)(wav_pred, wav_orig)
    loss = jax.block_until_ready(loss)

    ref = _cvc_loss_ref(wav_pred, wav_orig)
    assert jnp.allclose(loss, ref, rtol=1e-3, atol=1e-3), (float(loss), float(ref))

    print("KERNEL_OK")
</pallas_src>

<mosaic_0001>
module attributes {stable_mosaic.version = 11 : i64} {
  func.func @_cvc_loss_kernel(%arg0: i32, %arg1: memref<1x128x128xf32, #tpu.memory_space<vmem>>, %arg2: memref<1x128x128xf32, #tpu.memory_space<vmem>>, %arg3: memref<1x1x1xf32, #tpu.memory_space<vmem>>) attributes {dimension_semantics = [#tpu.dimension_semantics<parallel>], iteration_bounds = array<i64: 2>, scalar_prefetch = 0 : i64, scratch_operands = 0 : i64, tpu.core_type = #tpu.core_type<tc>, window_params = [{transform_indices = @transform_0, window_bounds = array<i64: 1, 128, 128>}, {transform_indices = @transform_1, window_bounds = array<i64: 1, 128, 128>}, {transform_indices = @transform_2, window_bounds = array<i64: 1, 1, 1>}]} {
    %c0 = arith.constant 0 : index
    %c0_0 = arith.constant 0 : index
    %c0_1 = arith.constant 0 : index
    %0 = vector.load %arg1[%c0, %c0_0, %c0_1] : memref<1x128x128xf32, #tpu.memory_space<vmem>>, vector<1x128x128xf32>
    %1 = vector.shape_cast %0 : vector<1x128x128xf32> to vector<128x128xf32>
    %c0_2 = arith.constant 0 : index
    %c0_3 = arith.constant 0 : index
    %c0_4 = arith.constant 0 : index
    %2 = vector.load %arg2[%c0_2, %c0_3, %c0_4] : memref<1x128x128xf32, #tpu.memory_space<vmem>>, vector<1x128x128xf32>
    %3 = vector.shape_cast %2 : vector<1x128x128xf32> to vector<128x128xf32>
    %4 = arith.mulf %1, %1 : vector<128x128xf32>
    %cst = arith.constant dense<0.000000e+00> : vector<128xf32>
    %5 = vector.multi_reduction <add>, %4, %cst [0] : vector<128x128xf32> to vector<128xf32>
    %6 = vector.shape_cast %5 : vector<128xf32> to vector<1x128xf32>
    %7 = math.rsqrt %6 : vector<1x128xf32>
    %8 = vector.broadcast %7 : vector<1x128xf32> to vector<128x128xf32>
    %9 = arith.mulf %1, %8 : vector<128x128xf32>
    %10 = arith.mulf %3, %3 : vector<128x128xf32>
    %cst_5 = arith.constant dense<0.000000e+00> : vector<128xf32>
    %11 = vector.multi_reduction <add>, %10, %cst_5 [0] : vector<128x128xf32> to vector<128xf32>
    %12 = vector.shape_cast %11 : vector<128xf32> to vector<1x128xf32>
    %13 = math.rsqrt %12 : vector<1x128xf32>
    %14 = vector.broadcast %13 : vector<1x128xf32> to vector<128x128xf32>
    %15 = arith.mulf %3, %14 : vector<128x128xf32>
    %16 = tpu.transpose %9, [1, 0] : vector<128x128xf32> -> vector<128x128xf32>
    %cst_6 = arith.constant dense<0.000000e+00> : vector<128x128xf32>
    %17 = tpu.matmul %16, %15, %cst_6 {dimension_numbers = #tpu.dot_dimension_numbers<[1], [0], [0], [1], [0, 0, 1, 1], [], []>} : vector<128x128xf32>, vector<128x128xf32>, vector<128x128xf32> -> vector<128x128xf32>
    %cst_7 = arith.constant dense<0.000000e+00> : vector<128x128xf32>
    %18 = tpu.matmul %16, %9, %cst_7 {dimension_numbers = #tpu.dot_dimension_numbers<[1], [0], [0], [1], [0, 0, 1, 1], [], []>} : vector<128x128xf32>, vector<128x128xf32>, vector<128x128xf32> -> vector<128x128xf32>
    %19 = tpu.iota {dimensions = array<i32: 0>} : vector<128x128xi32>
    %20 = tpu.iota {dimensions = array<i32: 1>} : vector<128x128xi32>
    %21 = arith.cmpi eq, %19, %20 : vector<128x128xi32>
    %cst_8 = arith.constant 0.000000e+00 : f32
    %22 = vector.broadcast %cst_8 : f32 to vector<128x128xf32>
    %23 = arith.select %21, %17, %22 : vector<128x128xi1>, vector<128x128xf32>
    %cst_9 = arith.constant dense<0.000000e+00> : vector<128xf32>
    %24 = vector.multi_reduction <add>, %23, %cst_9 [1] : vector<128x128xf32> to vector<128xf32>
    %25 = vector.shape_cast %24 : vector<128xf32> to vector<128x1xf32>
    %cst_10 = arith.constant dense<0.000000e+00> : vector<1xf32>
    %26 = vector.multi_reduction <add>, %25, %cst_10 [0] : vector<128x1xf32> to vector<1xf32>
    %27 = vector.shape_cast %26 : vector<1xf32> to vector<1x1xf32>
    %cst_11 = arith.constant 0.0666666701 : f32
    %28 = vector.broadcast %cst_11 : f32 to vector<1x1xf32>
    %29 = arith.mulf %27, %28 : vector<1x1xf32>
    %cst_12 = arith.constant -1.000000e+01 : f32
    %30 = vector.broadcast %cst_12 : f32 to vector<128x128xf32>
    %31 = arith.select %21, %30, %17 : vector<128x128xi1>, vector<128x128xf32>
    %cst_13 = arith.constant 0.0666666701 : f32
    %32 = vector.broadcast %cst_13 : f32 to vector<128x128xf32>
    %33 = arith.mulf %31, %32 : vector<128x128xf32>
    %cst_14 = arith.constant -1.000000e+01 : f32
    %34 = vector.broadcast %cst_14 : f32 to vector<128x128xf32>
    %35 = arith.select %21, %34, %18 : vector<128x128xi1>, vector<128x128xf32>
    %cst_15 = arith.constant 0.0666666701 : f32
    %36 = vector.broadcast %cst_15 : f32 to vector<128x128xf32>
    %37 = arith.mulf %35, %36 : vector<128x128xf32>
    %38 = arith.maximumf %33, %37 : vector<128x128xf32>
    %cst_16 = arith.constant dense<0xFF800000> : vector<128xf32>
    %39 = vector.multi_reduction <maximumf>, %38, %cst_16 [1] : vector<128x128xf32> to vector<128xf32>
    %40 = vector.shape_cast %39 : vector<128xf32> to vector<128x1xf32>
    %cst_17 = arith.constant dense<0xFF800000> : vector<1xf32>
    %41 = vector.multi_reduction <maximumf>, %40, %cst_17 [0] : vector<128x1xf32> to vector<1xf32>
    %42 = vector.shape_cast %41 : vector<1xf32> to vector<1x1xf32>
    %43 = arith.maximumf %42, %29 : vector<1x1xf32>
    %44 = arith.subf %29, %43 : vector<1x1xf32>
    %45 = math.exp %44 : vector<1x1xf32>
    %46 = vector.broadcast %43 : vector<1x1xf32> to vector<128x128xf32>
    %47 = arith.subf %33, %46 : vector<128x128xf32>
    %48 = math.exp %47 : vector<128x128xf32>
    %49 = vector.broadcast %43 : vector<1x1xf32> to vector<128x128xf32>
    %50 = arith.subf %37, %49 : vector<128x128xf32>
    %51 = math.exp %50 : vector<128x128xf32>
    %52 = arith.addf %48, %51 : vector<128x128xf32>
    %cst_18 = arith.constant dense<0.000000e+00> : vector<128xf32>
    %53 = vector.multi_reduction <add>, %52, %cst_18 [1] : vector<128x128xf32> to vector<128xf32>
    %54 = vector.shape_cast %53 : vector<128xf32> to vector<128x1xf32>
    %cst_19 = arith.constant dense<0.000000e+00> : vector<1xf32>
    %55 = vector.multi_reduction <add>, %54, %cst_19 [0] : vector<128x1xf32> to vector<1xf32>
    %56 = vector.shape_cast %55 : vector<1xf32> to vector<1x1xf32>
    %57 = arith.addf %45, %56 : vector<1x1xf32>
    %58 = math.log %57 : vector<1x1xf32>
    %59 = arith.addf %43, %58 : vector<1x1xf32>
    %60 = arith.subf %59, %29 : vector<1x1xf32>
    %c0_20 = arith.constant 0 : index
    %c0_21 = arith.constant 0 : index
    %c0_22 = arith.constant 0 : index
    %61 = vector.load %arg3[%c0_20, %c0_21, %c0_22] : memref<1x1x1xf32, #tpu.memory_space<vmem>>, vector<1x1x1xf32>
    %62 = vector.shape_cast %61 : vector<1x1x1xf32> to vector<1x1xf32>
    %63 = vector.shape_cast %60 : vector<1x1xf32> to vector<1x1x1xf32>
    tpu.vector_store %arg3[%c0_20, %c0_21, %c0_22], %63 {strides = array<i32>} : memref<1x1x1xf32, #tpu.memory_space<vmem>>, vector<1x1x1xf32>,
    return
  }
  func.func @transform_0(%arg0: i32) -> (i32, i32, i32) {
    %c0_i32 = arith.constant 0 : i32
    %c0_i32_0 = arith.constant 0 : i32
    %c0_i32_1 = arith.constant 0 : i32
    return %arg0, %c0_i32, %c0_i32_0 : i32, i32, i32
  }
  func.func @transform_1(%arg0: i32) -> (i32, i32, i32) {
    %c0_i32 = arith.constant 0 : i32
    %c0_i32_0 = arith.constant 0 : i32
    %c0_i32_1 = arith.constant 0 : i32
    return %arg0, %c0_i32, %c0_i32_0 : i32, i32, i32
  }
  func.func @transform_2(%arg0: i32) -> (i32, i32, i32) {
    %c0_i32 = arith.constant 0 : i32
    %c0_i32_0 = arith.constant 0 : i32
    %c0_i32_1 = arith.constant 0 : i32
    return %arg0, %c0_i32, %c0_i32_0 : i32, i32, i32
  }
}

</mosaic_0001>

<llo_original>
// kernel: cvc_loss.1
$region0: #{cvc_loss.1}
  #allocation0 [shape = 'u32[]', space=smem, size = 0x4, offset = 0x4, fixed_abs, tag = 'smem constant byte address 0x4 - core index']
  #allocation1 [shape = 'u32[144,128]{1,0:T(1,128)}', space=vmem, size = 0x12000, scoped, tag = 'internal scratch']
  %s0 = inlined_call_operand.hbm [shape: f32[2,128,128], index: 0, kind: input, shape index: {}]
  %s1 = inlined_call_operand.hbm [shape: f32[2,128,128], index: 1, kind: input, shape index: {}]
  %s2 = inlined_call_operand.vmem [shape: f32[2,1,1], index: 2, kind: output, shape index: {}]
  %s3 = sld [smem:[#allocation0]]
  $region49: #{cvc_loss.1} parent=0
    _
  %s5 = ssub.s32 1, %s3
  %s6 = scalar_select 0, %s5, %s3
  $region1: #{cvc_loss.1} parent=0
    #allocation2 [shape = 'u8[131072]{0}', space=vmem, size = 0x20000, scoped, tag = 'input window, operand 0']
    #allocation3 [shape = 's32[2]{0}', space=sflag, size = 0x8, scoped, tag = 'scoped memory for cvc_loss.1']
    #allocation4 [shape = 'u8[131072]{0}', space=vmem, size = 0x20000, scoped, tag = 'input window, operand 1']
    #allocation5 [shape = 's32[2]{0}', space=sflag, size = 0x8, scoped, tag = 'scoped memory for cvc_loss.1']
    %7 = vsyncpa [#allocation3], 0
    %s8 = scalar_lea.sflag [#allocation3], 1
    %9 = vsyncpa %s8, 0
    %10 = vsyncpa [#allocation5], 0
    %s11 = scalar_lea.sflag [#allocation5], 1
    %12 = vsyncpa %s11, 0
    loop: start=0, step=1, limit=4
    $region2: #{cvc_loss.1} parent=1 // loop_pre_header
      _
    $region3: #{cvc_loss.1} parent=1 // loop_header
      %s14 = sphi 0, %s18
      %p15 = scmp.ge.s32.totalorder %s14, 4
      %s24 = sphi 0, %s26
      %s27 = sphi 0, %s24
      %s28 = sphi 0, %s27
      %s44 = sphi 0, %s28
      %s50 = sphi 0, %s52
      %s53 = sphi 0, %s50
      %s54 = sphi 0, %s53
      %s70 = sphi 0, %s54
      %s76 = sphi 0, %s78
      %s79 = sphi 0, %s76
      %s80 = sphi 0, %s79
      %s96 = sphi 0, %s80
    $region4: #{cvc_loss.1} parent=1 // loop_header_branch
      %17 = sbr.rel (%p15) target = $region8
    $region5: #{cvc_loss.1} parent=1 // loop_body
      %s19 = ssub.s32 %s14, 1
      %s20 = ssub.s32 %s14, 2
      %s21 = sadd.s32 %s14, 1
      %s22 = ssub.s32 %s14, %s21
      %p23 = scmp.eq.s32.totalorder %s22, 0
      %s25 = sadd.s32 %s24, 1
      %s26 = scalar_select %p23, %s24, %s25
      %p29 = pneg %p23
      %p30 = scmp.eq.s32.totalorder %s14, 1
      %p31 = por %p29, %p30
      %p32 = scmp.ne.s32.totalorder %s24, %s27
      %p33 = scmp.eq.s32.totalorder %s14, 0
      %p34 = por %p32, %p33
      %p35 = scmp.ne.s32.totalorder %s24, %s27
      %p36 = scmp.eq.s32.totalorder %s19, 1
      %p37 = por %p35, %p36
      %p38 = scmp.ne.s32.totalorder %s27, %s28
      %p39 = scmp.eq.s32.totalorder %s19, 0
      %p40 = por %p38, %p39
      %p41 = scmp.ne.s32.totalorder %s27, %s28
      %p42 = scmp.eq.s32.totalorder %s20, 1
      %p43 = por %p41, %p42
      %p45 = scmp.ne.s32.totalorder %s28, %s44
      %p46 = scmp.eq.s32.totalorder %s20, 0
      %p47 = por %p45, %p46
      %s48 = ssub.s32 %s14, %s21
      %p49 = scmp.eq.s32.totalorder %s48, 0
      %s51 = sadd.s32 %s50, 1
      %s52 = scalar_select %p49, %s50, %s51
      %p55 = pneg %p49
      %p56 = scmp.eq.s32.totalorder %s14, 1
      %p57 = por %p55, %p56
      %p58 = scmp.ne.s32.totalorder %s50, %s53
      %p59 = scmp.eq.s32.totalorder %s14, 0
      %p60 = por %p58, %p59
      %p61 = scmp.ne.s32.totalorder %s50, %s53
      %p62 = scmp.eq.s32.totalorder %s19, 1
      %p63 = por %p61, %p62
      %p64 = scmp.ne.s32.totalorder %s53, %s54
      %p65 = scmp.eq.s32.totalorder %s19, 0
      %p66 = por %p64, %p65
      %p67 = scmp.ne.s32.totalorder %s53, %s54
      %p68 = scmp.eq.s32.totalorder %s20, 1
      %p69 = por %p67, %p68
      %p71 = scmp.ne.s32.totalorder %s54, %s70
      %p72 = scmp.eq.s32.totalorder %s20, 0
      %p73 = por %p71, %p72
      %s74 = ssub.s32 %s14, %s21
      %p75 = scmp.eq.s32.totalorder %s74, 0
      %s77 = sadd.s32 %s76, 1
      %s78 = scalar_select %p75, %s76, %s77
      %p81 = pneg %p75
      %p82 = scmp.eq.s32.totalorder %s14, 1
      %p83 = por %p81, %p82
      %p84 = scmp.ne.s32.totalorder %s76, %s79
      %p85 = scmp.eq.s32.totalorder %s14, 0
      %p86 = por %p84, %p85
      %p87 = scmp.ne.s32.totalorder %s76, %s79
      %p88 = scmp.eq.s32.totalorder %s19, 1
      %p89 = por %p87, %p88
      %p90 = scmp.ne.s32.totalorder %s79, %s80
      %p91 = scmp.eq.s32.totalorder %s19, 0
      %p92 = por %p90, %p91
      %p93 = scmp.ne.s32.totalorder %s79, %s80
      %p94 = scmp.eq.s32.totalorder %s20, 1
      %p95 = por %p93, %p94
      %p97 = scmp.ne.s32.totalorder %s80, %s96
      %p98 = scmp.eq.s32.totalorder %s20, 0
      %p99 = por %p97, %p98
      %p100 = scmp.le.s32.totalorder 1, %s14
      %p101 = scmp.lt.s32.totalorder %s14, 3
      %p102 = pnand %p100, %p101
      %p103 = pneg %p102
      // Predicated region
      $region9: #{cvc_loss.1} parent=5 // pred_check
        _
      $region10: #{cvc_loss.1} parent=5 // pred_check_branch
        %105 = sbr.rel (%p102) target = $region12
      $region11: #{cvc_loss.1} parent=5 // pred_region
        %s106 = ssub.s32 %s14, 1
      $region12: #{cvc_loss.1} parent=5 // pred_fallthru
        _
      %p107 = scmp.lt.s32.totalorder %s14, 2
      // Predicated region
      $region13: #{cvc_loss.1} parent=5 // pred_check
        %p108 = pneg %p107
      $region14: #{cvc_loss.1} parent=5 // pred_check_branch
        %110 = sbr.rel (%p108) target = $region16
      $region15: #{cvc_loss.1} parent=5 // pred_region
        // Predicated region
        $region17: #{cvc_loss.1} parent=15 // pred_check
          %p111 = pneg %p34
        $region18: #{cvc_loss.1} parent=15 // pred_check_branch
          %113 = sbr.rel (%p111) target = $region20
        $region19: #{cvc_loss.1} parent=15 // pred_region
          %s114 = sand.u32 %s24, 1
          %s115 = scalar_lea.sflag [#allocation3], %s114
          %s116 = sand.u32 %s24, 1
          %s117 = smul.addr %s116, 128
          %s118 = scalar_lea.vmem [#allocation2], %s117
          %s120 = ssub.s32 2048, 2048
          %121 = vsyncadd %s115, %s120
          %s122 = smul.addr %s14, 16
          %s123 = smul.addr %s122, 128
          %s124 = scalar_lea.hbm %s0, %s123
          %s125 = sshll.u32 %s118, 4
          %s126 = int_to_ptr.vmem [resolvable:$true] %s125
          %131 = dma.hbm_to_vmem [thread:$0]  %s124, 2048, %s126, %s115, 128, 128, 8
        $region20: #{cvc_loss.1} parent=15 // pred_fallthru
          _
        // Predicated region
        $region21: #{cvc_loss.1} parent=15 // pred_check
          %p132 = pneg %p60
        $region22: #{cvc_loss.1} parent=15 // pred_check_branch
          %134 = sbr.rel (%p132) target = $region24
        $region23: #{cvc_loss.1} parent=15 // pred_region
          %s135 = sand.u32 %s50, 1
          %s136 = scalar_lea.sflag [#allocation5], %s135
          %s137 = sand.u32 %s50, 1
          %s138 = smul.addr %s137, 128
          %s139 = scalar_lea.vmem [#allocation4], %s138
          %s141 = ssub.s32 2048, 2048
          %142 = vsyncadd %s136, %s141
          %s143 = smul.addr %s14, 16
          %s144 = smul.addr %s143, 128
          %s145 = scalar_lea.hbm %s1, %s144
          %s146 = sshll.u32 %s139, 4
          %s147 = int_to_ptr.vmem [resolvable:$true] %s146
          %152 = dma.hbm_to_vmem [thread:$0]  %s145, 2048, %s147, %s136, 128, 128, 8
        $region24: #{cvc_loss.1} parent=15 // pred_fallthru
          _
      $region16: #{cvc_loss.1} parent=5 // pred_fallthru
        _
      %p153 = scmp.le.s32.totalorder 1, %s14
      %p154 = scmp.lt.s32.totalorder %s14, 3
      %p155 = pnand %p153, %p154
      %p156 = pneg %p155
      // Predicated region
      $region25: #{cvc_loss.1} parent=5 // pred_check
        _
      $region26: #{cvc_loss.1} parent=5 // pred_check_branch
        %158 = sbr.rel (%p155) target = $region28
      $region27: #{cvc_loss.1} parent=5 // pred_region
        %s159 = ssub.s32 %s14, 1
        %s160 = sand.u32 %s27, 1
        %s161 = scalar_lea.sflag [#allocation3], %s160
        %s162 = sand.u32 %s27, 1
        %s163 = smul.addr %s162, 128
        %s164 = scalar_lea.vmem [#allocation2], %s163
        // Predicated region
        $region29: #{cvc_loss.1} parent=27 // pred_check
          %p165 = pneg %p40
        $region30: #{cvc_loss.1} parent=27 // pred_check_branch
          %167 = sbr.rel (%p165) target = $region32
        $region31: #{cvc_loss.1} parent=27 // pred_region
          %168 = dma.done %s161, 2048
        $region32: #{cvc_loss.1} parent=27 // pred_fallthru
          _
        %s169 = sand.u32 %s53, 1
        %s170 = scalar_lea.sflag [#allocation5], %s169
        %s171 = sand.u32 %s53, 1
        %s172 = smul.addr %s171, 128
        %s173 = scalar_lea.vmem [#allocation4], %s172
        // Predicated region
        $region33: #{cvc_loss.1} parent=27 // pred_check
          %p174 = pneg %p66
        $region34: #{cvc_loss.1} parent=27 // pred_check_branch
          %176 = sbr.rel (%p174) target = $region36
        $region35: #{cvc_loss.1} parent=27 // pred_region
          %177 = dma.done %s170, 2048
        $region36: #{cvc_loss.1} parent=27 // pred_fallthru
          _
        %s178 = sand.u32 %s27, 1
        %s179 = scalar_lea.sflag [#allocation3], %s178
        %s180 = sand.u32 %s27, 1
        %s181 = smul.addr %s180, 128
        %s182 = scalar_lea.vmem [#allocation2], %s181
        %p183 = pneg %p40
        %p184 = pneg %p37
        %s185 = sand.u32 %s53, 1
        %s186 = scalar_lea.sflag [#allocation5], %s185
        %s187 = sand.u32 %s53, 1
        %s188 = smul.addr %s187, 128
        %s189 = scalar_lea.vmem [#allocation4], %s188
        %p190 = pneg %p66
        %p191 = pneg %p63
        %p192 = pneg %p92
        %p193 = pneg %p89
        %p194 = scmp.lt.s32.totalorder %s19, 1
        %s195 = scalar_select %p194, %s19, 1
        %s196 = scalar_lea.vmem %s2, %s195
        %p197 = scmp.lt.s32.totalorder %s19, 1
        %s198 = scalar_select %p197, %s19, 1
        %s199 = scalar_lea.vmem %s2, %s198
        %v200 = vld [vmem:[%s164] sm:$0xff]
        %v201 = vld [vmem:[%s164 + $0x8] sm:$0xff]
        %v202 = vld [vmem:[%s164 + $0x10] sm:$0xff]
        %v203 = vld [vmem:[%s164 + $0x18] sm:$0xff]
        %v204 = vld [vmem:[%s164 + $0x20] sm:$0xff]
        %v205 = vld [vmem:[%s164 + $0x28] sm:$0xff]
        %v206 = vld [vmem:[%s164 + $0x30] sm:$0xff]
        %v207 = vld [vmem:[%s164 + $0x38] sm:$0xff]
        %v208 = vld [vmem:[%s164 + $0x40] sm:$0xff]
        %v209 = vld [vmem:[%s164 + $0x48] sm:$0xff]
        %v210 = vld [vmem:[%s164 + $0x50] sm:$0xff]
        %v211 = vld [vmem:[%s164 + $0x58] sm:$0xff]
        %v212 = vld [vmem:[%s164 + $0x60] sm:$0xff]
        %v213 = vld [vmem:[%s164 + $0x68] sm:$0xff]
        %v214 = vld [vmem:[%s164 + $0x70] sm:$0xff]
        %v215 = vld [vmem:[%s164 + $0x78] sm:$0xff]
        %v216 = vld [vmem:[%s173] sm:$0xff]
        %v217 = vld [vmem:[%s173 + $0x8] sm:$0xff]
        %v218 = vld [vmem:[%s173 + $0x10] sm:$0xff]
        %v219 = vld [vmem:[%s173 + $0x18] sm:$0xff]
        %v220 = vld [vmem:[%s173 + $0x20] sm:$0xff]
        %v221 = vld [vmem:[%s173 + $0x28] sm:$0xff]
        %v222 = vld [vmem:[%s173 + $0x30] sm:$0xff]
        %v223 = vld [vmem:[%s173 + $0x38] sm:$0xff]
        %v224 = vld [vmem:[%s173 + $0x40] sm:$0xff]
        %v225 = vld [vmem:[%s173 + $0x48] sm:$0xff]
        %v226 = vld [vmem:[%s173 + $0x50] sm:$0xff]
        %v227 = vld [vmem:[%s173 + $0x58] sm:$0xff]
        %v228 = vld [vmem:[%s173 + $0x60] sm:$0xff]
        %v229 = vld [vmem:[%s173 + $0x68] sm:$0xff]
        %v230 = vld [vmem:[%s173 + $0x70] sm:$0xff]
        %v231 = vld [vmem:[%s173 + $0x78] sm:$0xff]
        %v232 = vmul.f32 %v200, %v200
        %v233 = vmul.f32 %v201, %v201
        %v234 = vmul.f32 %v202, %v202
        %v235 = vmul.f32 %v203, %v203
        %v236 = vmul.f32 %v204, %v204
        %v237 = vmul.f32 %v205, %v205
        %v238 = vmul.f32 %v206, %v206
        %v239 = vmul.f32 %v207, %v207
        %v240 = vmul.f32 %v208, %v208
        %v241 = vmul.f32 %v209, %v209
        %v242 = vmul.f32 %v210, %v210
        %v243 = vmul.f32 %v211, %v211
        %v244 = vmul.f32 %v212, %v212
        %v245 = vmul.f32 %v213, %v213
        %v246 = vmul.f32 %v214, %v214
        %v247 = vmul.f32 %v215, %v215
        %v248 = vadd.f32 %v232, %v233
        %v249 = vadd.f32 %v248, %v234
        %v250 = vadd.f32 %v249, %v235
        %v251 = vadd.f32 %v250, %v236
        %v252 = vadd.f32 %v251, %v237
        %v253 = vadd.f32 %v252, %v238
        %v254 = vadd.f32 %v253, %v239
        %v255 = vadd.f32 %v254, %v240
        %v256 = vadd.f32 %v255, %v241
        %v257 = vadd.f32 %v256, %v242
        %v258 = vadd.f32 %v257, %v243
        %v259 = vadd.f32 %v258, %v244
        %v260 = vadd.f32 %v259, %v245
        %v261 = vadd.f32 %v260, %v246
        %v262 = vadd.f32 %v261, %v247
        %v263 = vrot.slane %v262, 4
        %v264 = vadd.f32 %v262, %v263
        %v265 = vrot.slane %v264, 2
        %v266 = vadd.f32 %v264, %v265
        %v267 = vrot.slane %v266, 1
        %v268 = vadd.f32 %v266, %v267
        %v269 = vrsqrt.pop %v268
        %v270 = vmul.f32 %v200, %v269
        %v271 = vmul.f32 %v201, %v269
        %v272 = vmul.f32 %v202, %v269
        %v273 = vmul.f32 %v203, %v269
        %v274 = vmul.f32 %v204, %v269
        %v275 = vmul.f32 %v205, %v269
        %v276 = vmul.f32 %v206, %v269
        %v277 = vmul.f32 %v207, %v269
        %v278 = vmul.f32 %v208, %v269
        %v279 = vmul.f32 %v209, %v269
        %v280 = vmul.f32 %v210, %v269
        %v281 = vmul.f32 %v211, %v269
        %v282 = vmul.f32 %v212, %v269
        %v283 = vmul.f32 %v213, %v269
        %v284 = vmul.f32 %v214, %v269
        %v285 = vmul.f32 %v215, %v269
        %v286 = vmul.f32 %v216, %v216
        %v287 = vmul.f32 %v217, %v217
        %v288 = vmul.f32 %v218, %v218
        %v289 = vmul.f32 %v219, %v219
        %v290 = vmul.f32 %v220, %v220
        %v291 = vmul.f32 %v221, %v221
        %v292 = vmul.f32 %v222, %v222
        %v293 = vmul.f32 %v223, %v223
        %v294 = vmul.f32 %v224, %v224
        %v295 = vmul.f32 %v225, %v225
        %v296 = vmul.f32 %v226, %v226
        %v297 = vmul.f32 %v227, %v227
        %v298 = vmul.f32 %v228, %v228
        %v299 = vmul.f32 %v229, %v229
        %v300 = vmul.f32 %v230, %v230
        %v301 = vmul.f32 %v231, %v231
        %v302 = vadd.f32 %v286, %v287
        %v303 = vadd.f32 %v302, %v288
        %v304 = vadd.f32 %v303, %v289
        %v305 = vadd.f32 %v304, %v290
        %v306 = vadd.f32 %v305, %v291
        %v307 = vadd.f32 %v306, %v292
        %v308 = vadd.f32 %v307, %v293
        %v309 = vadd.f32 %v308, %v294
        %v310 = vadd.f32 %v309, %v295
        %v311 = vadd.f32 %v310, %v296
        %v312 = vadd.f32 %v311, %v297
        %v313 = vadd.f32 %v312, %v298
        %v314 = vadd.f32 %v313, %v299
        %v315 = vadd.f32 %v314, %v300
        %v316 = vadd.f32 %v315, %v301
        %v317 = vrot.slane %v316, 4
        %v318 = vadd.f32 %v316, %v317
        %v319 = vrot.slane %v318, 2
        %v320 = vadd.f32 %v318, %v319
        %v321 = vrot.slane %v320, 1
        %v322 = vadd.f32 %v320, %v321
        %v323 = vrsqrt.pop %v322
        %v324 = vmul.f32 %v216, %v323
        %v325 = vmul.f32 %v217, %v323
        %v326 = vmul.f32 %v218, %v323
        %v327 = vmul.f32 %v219, %v323
        %v328 = vmul.f32 %v220, %v323
        %v329 = vmul.f32 %v221, %v323
        %v330 = vmul.f32 %v222, %v323
        %v331 = vmul.f32 %v223, %v323
        %v332 = vmul.f32 %v224, %v323
        %v333 = vmul.f32 %v225, %v323
        %v334 = vmul.f32 %v226, %v323
        %v335 = vmul.f32 %v227, %v323
        %v336 = vmul.f32 %v228, %v323
        %v337 = vmul.f32 %v229, %v323
        %v338 = vmul.f32 %v230, %v323
        %v339 = vmul.f32 %v231, %v323
        %340 = vxpose.xlu0.b32.start [1/16] %v270, 128
        %341 = vxpose.xlu0.b32.cont [2/16] %v271, 128
        %342 = vxpose.xlu0.b32.cont [3/16] %v272, 128
        %343 = vxpose.xlu0.b32.cont [4/16] %v273, 128
        %344 = vxpose.xlu0.b32.cont [5/16] %v274, 128
        %345 = vxpose.xlu0.b32.cont [6/16] %v275, 128
        %346 = vxpose.xlu0.b32.cont [7/16] %v276, 128
        %347 = vxpose.xlu0.b32.cont [8/16] %v277, 128
        %348 = vxpose.xlu0.b32.cont [9/16] %v278, 128
        %349 = vxpose.xlu0.b32.cont [10/16] %v279, 128
        %350 = vxpose.xlu0.b32.cont [11/16] %v280, 128
        %351 = vxpose.xlu0.b32.cont [12/16] %v281, 128
        %352 = vxpose.xlu0.b32.cont [13/16] %v282, 128
        %353 = vxpose.xlu0.b32.cont [14/16] %v283, 128
        %354 = vxpose.xlu0.b32.cont [15/16] %v284, 128
        %355 = vxpose.xlu0.b32.end [16/16] %v285, 128
        %v356 = vpop.trf.xlu0
        %v357 = vpop.trf.xlu0
        %v358 = vpop.trf.xlu0
        %v359 = vpop.trf.xlu0
        %v360 = vpop.trf.xlu0
        %v361 = vpop.trf.xlu0
        %v362 = vpop.trf.xlu0
        %v363 = vpop.trf.xlu0
        %v364 = vpop.trf.xlu0
        %v365 = vpop.trf.xlu0
        %v366 = vpop.trf.xlu0
        %v367 = vpop.trf.xlu0
        %v368 = vpop.trf.xlu0
        %v369 = vpop.trf.xlu0
        %v370 = vpop.trf.xlu0
        %v371 = vpop.trf.xlu0
        %372 = vmatprep.subr.mxu0 0.0
        %373 = vmatpush1.msra.mxu0 %v324
        %374 = vmatprep.subr.mxu0 0.0
        %375 = vmatpush1.msra.mxu0 %v325
        %376 = vmatprep.subr.mxu0 0.0
        %377 = vmatpush1.msra.mxu0 %v326
        %378 = vmatprep.subr.mxu0 0.0
        %379 = vmatpush1.msra.mxu0 %v327
        %380 = vmatprep.subr.mxu0 0.0
        %381 = vmatpush1.msra.mxu0 %v328
        %382 = vmatprep.subr.mxu0 0.0
        %383 = vmatpush1.msra.mxu0 %v329
        %384 = vmatprep.subr.mxu0 0.0
        %385 = vmatpush1.msra.mxu0 %v330
        %386 = vmatprep.subr.mxu0 0.0
        %387 = vmatpush1.msra.mxu0 %v331
        %388 = vmatprep.subr.mxu0 0.0
        %389 = vmatpush1.msra.mxu0 %v332
        %390 = vmatprep.subr.mxu0 0.0
        %391 = vmatpush1.msra.mxu0 %v333
        %392 = vmatprep.subr.mxu0 0.0
        %393 = vmatpush1.msra.mxu0 %v334
        %394 = vmatprep.subr.mxu0 0.0
        %395 = vmatpush1.msra.mxu0 %v335
        %396 = vmatprep.subr.mxu0 0.0
        %397 = vmatpush1.msra.mxu0 %v336
        %398 = vmatprep.subr.mxu0 0.0
        %399 = vmatpush1.msra.mxu0 %v337
        %400 = vmatprep.subr.mxu0 0.0
        %401 = vmatpush1.msra.mxu0 %v338
        %402 = vmatprep.subr.mxu0 0.0
        %403 = vmatpush1.msra.mxu0 %v339
        %404 = vmatprep.subr.mxu0 0.0
        %405 = vmatpush1.msra.mxu0 0.0
        %406 = vmatprep.subr.mxu0 0.0
        %407 = vmatpush1.msra.mxu0 0.0
        %408 = vmatprep.subr.mxu0 0.0
        %409 = vmatpush1.msra.mxu0 0.0
        %410 = vmatprep.subr.mxu0 0.0
        %411 = vmatpush1.msra.mxu0 0.0
        %412 = vmatprep.subr.mxu0 0.0
        %413 = vmatpush1.msra.mxu0 0.0
        %414 = vmatprep.subr.mxu0 0.0
        %415 = vmatpush1.msra.mxu0 0.0
        %416 = vmatprep.subr.mxu0 0.0
        %417 = vmatpush1.msra.mxu0 0.0
        %418 = vmatprep.subr.mxu0 0.0
        %419 = vmatpush1.msra.mxu0 0.0
        %420 = vmatprep.subr.mxu0 0.0
        %421 = vmatpush1.msra.mxu0 0.0
        %422 = vmatprep.subr.mxu0 0.0
        %423 = vmatpush1.msra.mxu0 0.0
        %424 = vmatprep.subr.mxu0 0.0
        %425 = vmatpush1.msra.mxu0 0.0
        %426 = vmatprep.subr.mxu0 0.0
        %427 = vmatpush1.msra.mxu0 0.0
        %428 = vmatprep.subr.mxu0 0.0
        %429 = vmatpush1.msra.mxu0 0.0
        %430 = vmatprep.subr.mxu0 0.0
        %431 = vmatpush1.msra.mxu0 0.0
        %432 = vmatprep.subr.mxu0 0.0
        %433 = vmatpush1.msra.mxu0 0.0
        %434 = vmatprep.subr.mxu0 0.0
        %435 = vmatpush1.msra.mxu0 0.0
        %436 = vmatprep.mubr.f32.mxu0 0.0
        %437 = vmatmul.mubr.f32.gmra.mrb[0].mxu0 %v356
        %v438 = vpop.f32.mrb[0].mxu0
        %v439 = vadd.f32 0.0, %v438
        %v440 = vpop.f32.mrb[0].mxu0
        %441 = vmatprep.mubr.f32.mxu0 0.0
        %442 = vmatmul.mubr.f32.gmra.mrb[0].mxu0 %v357
        %v443 = vpop.f32.mrb[0].mxu0
        %v444 = vadd.f32 0.0, %v443
        %v445 = vpop.f32.mrb[0].mxu0
        %446 = vmatprep.mubr.f32.mxu0 0.0
        %447 = vmatmul.mubr.f32.gmra.mrb[0].mxu0 %v358
        %v448 = vpop.f32.mrb[0].mxu0
        %v449 = vadd.f32 0.0, %v448
        %v450 = vpop.f32.mrb[0].mxu0
        %451 = vmatprep.mubr.f32.mxu0 0.0
        %452 = vmatmul.mubr.f32.gmra.mrb[0].mxu0 %v359
        %v453 = vpop.f32.mrb[0].mxu0
        %v454 = vadd.f32 0.0, %v453
        %v455 = vpop.f32.mrb[0].mxu0
        %456 = vmatprep.mubr.f32.mxu0 0.0
        %457 = vmatmul.mubr.f32.gmra.mrb[0].mxu0 %v360
        %v458 = vpop.f32.mrb[0].mxu0
        %v459 = vadd.f32 0.0, %v458
        %v460 = vpop.f32.mrb[0].mxu0
        %461 = vmatprep.mubr.f32.mxu0 0.0
        %462 = vmatmul.mubr.f32.gmra.mrb[0].mxu0 %v361
        %v463 = vpop.f32.mrb[0].mxu0
        %v464 = vadd.f32 0.0, %v463
        %v465 = vpop.f32.mrb[0].mxu0
        %466 = vmatprep.mubr.f32.mxu0 0.0
        %467 = vmatmul.mubr.f32.gmra.mrb[0].mxu0 %v362
        %v468 = vpop.f32.mrb[0].mxu0
        %v469 = vadd.f32 0.0, %v468
        %v470 = vpop.f32.mrb[0].mxu0
        %471 = vmatprep.mubr.f32.mxu0 0.0
        %472 = vmatmul.mubr.f32.gmra.mrb[0].mxu0 %v363
        %v473 = vpop.f32.mrb[0].mxu0
        %v474 = vadd.f32 0.0, %v473
        %v475 = vpop.f32.mrb[0].mxu0
        %476 = vmatprep.mubr.f32.mxu0 0.0
        %477 = vmatmul.mubr.f32.gmra.mrb[0].mxu0 %v364
        %v478 = vpop.f32.mrb[0].mxu0
        %v479 = vadd.f32 0.0, %v478
        %v480 = vpop.f32.mrb[0].mxu0
        %481 = vmatprep.mubr.f32.mxu0 0.0
        %482 = vmatmul.mubr.f32.gmra.mrb[0].mxu0 %v365
        %v483 = vpop.f32.mrb[0].mxu0
        %v484 = vadd.f32 0.0, %v483
        %v485 = vpop.f32.mrb[0].mxu0
        %486 = vmatprep.mubr.f32.mxu0 0.0
        %487 = vmatmul.mubr.f32.gmra.mrb[0].mxu0 %v366
        %v488 = vpop.f32.mrb[0].mxu0
        %v489 = vadd.f32 0.0, %v488
        %v490 = vpop.f32.mrb[0].mxu0
        %491 = vmatprep.mubr.f32.mxu0 0.0
        %492 = vmatmul.mubr.f32.gmra.mrb[0].mxu0 %v367
        %v493 = vpop.f32.mrb[0].mxu0
        %v494 = vadd.f32 0.0, %v493
        %v495 = vpop.f32.mrb[0].mxu0
        %496 = vmatprep.mubr.f32.mxu0 0.0
        %497 = vmatmul.mubr.f32.gmra.mrb[0].mxu0 %v368
        %v498 = vpop.f32.mrb[0].mxu0
        %v499 = vadd.f32 0.0, %v498
        %v500 = vpop.f32.mrb[0].mxu0
        %501 = vmatprep.mubr.f32.mxu0 0.0
        %502 = vmatmul.mubr.f32.gmra.mrb[0].mxu0 %v369
        %v503 = vpop.f32.mrb[0].mxu0
        %v504 = vadd.f32 0.0, %v503
        %v505 = vpop.f32.mrb[0].mxu0
        %506 = vmatprep.mubr.f32.mxu0 0.0
        %507 = vmatmul.mubr.f32.gmra.mrb[0].mxu0 %v370
        %v508 = vpop.f32.mrb[0].mxu0
        %v509 = vadd.f32 0.0, %v508
        %v510 = vpop.f32.mrb[0].mxu0
        %511 = vmatprep.mubr.f32.mxu0 0.0
        %512 = vmatmul.mubr.f32.gmra.mrb[0].mxu0 %v371
        %v513 = vpop.f32.mrb[0].mxu0
        %v514 = vadd.f32 0.0, %v513
        %v515 = vpop.f32.mrb[0].mxu0
        %516 = vdwg.mxu0
        %517 = vmatprep.subr.mxu0 0.0
        %518 = vmatpush1.msra.mxu0 %v270
        %519 = vmatprep.subr.mxu0 0.0
        %520 = vmatpush1.msra.mxu0 %v271
        %521 = vmatprep.subr.mxu0 0.0
        %522 = vmatpush1.msra.mxu0 %v272
        %523 = vmatprep.subr.mxu0 0.0
        %524 = vmatpush1.msra.mxu0 %v273
        %525 = vmatprep.subr.mxu0 0.0
        %526 = vmatpush1.msra.mxu0 %v274
        %527 = vmatprep.subr.mxu0 0.0
        %528 = vmatpush1.msra.mxu0 %v275
        %529 = vmatprep.subr.mxu0 0.0
        %530 = vmatpush1.msra.mxu0 %v276
        %531 = vmatprep.subr.mxu0 0.0
        %532 = vmatpush1.msra.mxu0 %v277
        %533 = vmatprep.subr.mxu0 0.0
        %534 = vmatpush1.msra.mxu0 %v278
        %535 = vmatprep.subr.mxu0 0.0
        %536 = vmatpush1.msra.mxu0 %v279
        %537 = vmatprep.subr.mxu0 0.0
        %538 = vmatpush1.msra.mxu0 %v280
        %539 = vmatprep.subr.mxu0 0.0
        %540 = vmatpush1.msra.mxu0 %v281
        %541 = vmatprep.subr.mxu0 0.0
        %542 = vmatpush1.msra.mxu0 %v282
        %543 = vmatprep.subr.mxu0 0.0
        %544 = vmatpush1.msra.mxu0 %v283
        %545 = vmatprep.subr.mxu0 0.0
        %546 = vmatpush1.msra.mxu0 %v284
        %547 = vmatprep.subr.mxu0 0.0
        %548 = vmatpush1.msra.mxu0 %v285
        %549 = vmatprep.subr.mxu0 0.0
        %550 = vmatpush1.msra.mxu0 0.0
        %551 = vmatprep.subr.mxu0 0.0
        %552 = vmatpush1.msra.mxu0 0.0
        %553 = vmatprep.subr.mxu0 0.0
        %554 = vmatpush1.msra.mxu0 0.0
        %555 = vmatprep.subr.mxu0 0.0
        %556 = vmatpush1.msra.mxu0 0.0
        %557 = vmatprep.subr.mxu0 0.0
        %558 = vmatpush1.msra.mxu0 0.0
        %559 = vmatprep.subr.mxu0 0.0
        %560 = vmatpush1.msra.mxu0 0.0
        %561 = vmatprep.subr.mxu0 0.0
        %562 = vmatpush1.msra.mxu0 0.0
        %563 = vmatprep.subr.mxu0 0.0
        %564 = vmatpush1.msra.mxu0 0.0
        %565 = vmatprep.subr.mxu0 0.0
        %566 = vmatpush1.msra.mxu0 0.0
        %567 = vmatprep.subr.mxu0 0.0
        %568 = vmatpush1.msra.mxu0 0.0
        %569 = vmatprep.subr.mxu0 0.0
        %570 = vmatpush1.msra.mxu0 0.0
        %571 = vmatprep.subr.mxu0 0.0
        %572 = vmatpush1.msra.mxu0 0.0
        %573 = vmatprep.subr.mxu0 0.0
        %574 = vmatpush1.msra.mxu0 0.0
        %575 = vmatprep.subr.mxu0 0.0
        %576 = vmatpush1.msra.mxu0 0.0
        %577 = vmatprep.subr.mxu0 0.0
        %578 = vmatpush1.msra.mxu0 0.0
        %579 = vmatprep.subr.mxu0 0.0
        %580 = vmatpush1.msra.mxu0 0.0
        %581 = vmatprep.mubr.f32.mxu0 0.0
        %582 = vmatmul.mubr.f32.gmra.mrb[0].mxu0 %v356
        %v583 = vpop.f32.mrb[0].mxu0
        %v584 = vadd.f32 0.0, %v583
        %v585 = vpop.f32.mrb[0].mxu0
        %586 = vmatprep.mubr.f32.mxu0 0.0
        %587 = vmatmul.mubr.f32.gmra.mrb[0].mxu0 %v357
        %v588 = vpop.f32.mrb[0].mxu0
        %v589 = vadd.f32 0.0, %v588
        %v590 = vpop.f32.mrb[0].mxu0
        %591 = vmatprep.mubr.f32.mxu0 0.0
        %592 = vmatmul.mubr.f32.gmra.mrb[0].mxu0 %v358
        %v593 = vpop.f32.mrb[0].mxu0
        %v594 = vadd.f32 0.0, %v593
        %v595 = vpop.f32.mrb[0].mxu0
        %596 = vmatprep.mubr.f32.mxu0 0.0
        %597 = vmatmul.mubr.f32.gmra.mrb[0].mxu0 %v359
        %v598 = vpop.f32.mrb[0].mxu0
        %v599 = vadd.f32 0.0, %v598
        %v600 = vpop.f32.mrb[0].mxu0
        %601 = vmatprep.mubr.f32.mxu0 0.0
        %602 = vmatmul.mubr.f32.gmra.mrb[0].mxu0 %v360
        %v603 = vpop.f32.mrb[0].mxu0
        %v604 = vadd.f32 0.0, %v603
        %v605 = vpop.f32.mrb[0].mxu0
        %606 = vmatprep.mubr.f32.mxu0 0.0
        %607 = vmatmul.mubr.f32.gmra.mrb[0].mxu0 %v361
        %v608 = vpop.f32.mrb[0].mxu0
        %v609 = vadd.f32 0.0, %v608
        %v610 = vpop.f32.mrb[0].mxu0
        %611 = vmatprep.mubr.f32.mxu0 0.0
        %612 = vmatmul.mubr.f32.gmra.mrb[0].mxu0 %v362
        %v613 = vpop.f32.mrb[0].mxu0
        %v614 = vadd.f32 0.0, %v613
        %v615 = vpop.f32.mrb[0].mxu0
        %616 = vmatprep.mubr.f32.mxu0 0.0
        %617 = vmatmul.mubr.f32.gmra.mrb[0].mxu0 %v363
        %v618 = vpop.f32.mrb[0].mxu0
        %v619 = vadd.f32 0.0, %v618
        %v620 = vpop.f32.mrb[0].mxu0
        %621 = vmatprep.mubr.f32.mxu0 0.0
        %622 = vmatmul.mubr.f32.gmra.mrb[0].mxu0 %v364
        %v623 = vpop.f32.mrb[0].mxu0
        %v624 = vadd.f32 0.0, %v623
        %v625 = vpop.f32.mrb[0].mxu0
        %626 = vmatprep.mubr.f32.mxu0 0.0
        %627 = vmatmul.mubr.f32.gmra.mrb[0].mxu0 %v365
        %v628 = vpop.f32.mrb[0].mxu0
        %v629 = vadd.f32 0.0, %v628
        %v630 = vpop.f32.mrb[0].mxu0
        %631 = vmatprep.mubr.f32.mxu0 0.0
        %632 = vmatmul.mubr.f32.gmra.mrb[0].mxu0 %v366
        %v633 = vpop.f32.mrb[0].mxu0
        %v634 = vadd.f32 0.0, %v633
        %v635 = vpop.f32.mrb[0].mxu0
        %636 = vmatprep.mubr.f32.mxu0 0.0
        %637 = vmatmul.mubr.f32.gmra.mrb[0].mxu0 %v367
        %v638 = vpop.f32.mrb[0].mxu0
        %v639 = vadd.f32 0.0, %v638
        %v640 = vpop.f32.mrb[0].mxu0
        %641 = vmatprep.mubr.f32.mxu0 0.0
        %642 = vmatmul.mubr.f32.gmra.mrb[0].mxu0 %v368
        %v643 = vpop.f32.mrb[0].mxu0
        %v644 = vadd.f32 0.0, %v643
        %v645 = vpop.f32.mrb[0].mxu0
        %646 = vmatprep.mubr.f32.mxu0 0.0
        %647 = vmatmul.mubr.f32.gmra.mrb[0].mxu0 %v369
        %v648 = vpop.f32.mrb[0].mxu0
        %v649 = vadd.f32 0.0, %v648
        %v650 = vpop.f32.mrb[0].mxu0
        %651 = vmatprep.mubr.f32.mxu0 0.0
        %652 = vmatmul.mubr.f32.gmra.mrb[0].mxu0 %v370
        %v653 = vpop.f32.mrb[0].mxu0
        %v654 = vadd.f32 0.0, %v653
        %v655 = vpop.f32.mrb[0].mxu0
        %656 = vmatprep.mubr.f32.mxu0 0.0
        %657 = vmatmul.mubr.f32.gmra.mrb[0].mxu0 %v371
        %v658 = vpop.f32.mrb[0].mxu0
        %v659 = vadd.f32 0.0, %v658
        %v660 = vpop.f32.mrb[0].mxu0
        %661 = vdwg.mxu0
        %v662 = vlaneseq
        %v663 = vshrl.u32 %v662, 7
        %v664 = vadd.s32 %v663, 8
        %v665 = vadd.s32 %v663, 16
        %v666 = vadd.s32 %v663, 24
        %v667 = vadd.s32 %v663, 32
        %v668 = vadd.s32 %v663, 40
        %v669 = vadd.s32 %v663, 48
        %v670 = vadd.s32 %v663, 56
        %v671 = vadd.s32 %v663, 64
        %v672 = vadd.s32 %v663, 72
        %v673 = vadd.s32 %v663, 80
        %v674 = vadd.s32 %v663, 88
        %v675 = vadd.s32 %v663, 96
        %v676 = vadd.s32 %v663, 104
        %v677 = vadd.s32 %v663, 112
        %v678 = vadd.s32 %v663, 120
        %v679 = vlaneseq
        %v680 = vand.u32 %v679, 127
        %vm681 = vcmp.eq.s32.totalorder %v663, %v680
        %vm682 = vcmp.eq.s32.totalorder %v664, %v680
        %vm683 = vcmp.eq.s32.totalorder %v665, %v680
        %vm684 = vcmp.eq.s32.totalorder %v666, %v680
        %vm685 = vcmp.eq.s32.totalorder %v667, %v680
        %vm686 = vcmp.eq.s32.totalorder %v668, %v680
        %vm687 = vcmp.eq.s32.totalorder %v669, %v680
        %vm688 = vcmp.eq.s32.totalorder %v670, %v680
        %vm689 = vcmp.eq.s32.totalorder %v671, %v680
        %vm690 = vcmp.eq.s32.totalorder %v672, %v680
        %vm691 = vcmp.eq.s32.totalorder %v673, %v680
        %vm692 = vcmp.eq.s32.totalorder %v674, %v680
        %vm693 = vcmp.eq.s32.totalorder %v675, %v680
        %vm694 = vcmp.eq.s32.totalorder %v676, %v680
        %vm695 = vcmp.eq.s32.totalorder %v677, %v680
        %vm696 = vcmp.eq.s32.totalorder %v678, %v680
        %v697 = vsel %vm681, %v439, 0.0
        %v698 = vsel %vm682, %v444, 0.0
        %v699 = vsel %vm683, %v449, 0.0
        %v700 = vsel %vm684, %v454, 0.0
        %v701 = vsel %vm685, %v459, 0.0
        %v702 = vsel %vm686, %v464, 0.0
        %v703 = vsel %vm687, %v469, 0.0
        %v704 = vsel %vm688, %v474, 0.0
        %v705 = vsel %vm689, %v479, 0.0
        %v706 = vsel %vm690, %v484, 0.0
        %v707 = vsel %vm691, %v489, 0.0
        %v708 = vsel %vm692, %v494, 0.0
        %v709 = vsel %vm693, %v499, 0.0
        %v710 = vsel %vm694, %v504, 0.0
        %v711 = vsel %vm695, %v509, 0.0
        %v712 = vsel %vm696, %v514, 0.0
        %713 = vadd.xlane.f32.xlu0 %v697
        %v714 = vpop.xlane.xlu0 %713
        %715 = vadd.xlane.f32.xlu0 %v698
        %v716 = vpop.xlane.xlu0 %715
        %717 = vadd.xlane.f32.xlu0 %v699
        %v718 = vpop.xlane.xlu0 %717
        %719 = vadd.xlane.f32.xlu0 %v700
        %v720 = vpop.xlane.xlu0 %719
        %721 = vadd.xlane.f32.xlu0 %v701
        %v722 = vpop.xlane.xlu0 %721
        %723 = vadd.xlane.f32.xlu0 %v702
        %v724 = vpop.xlane.xlu0 %723
        %725 = vadd.xlane.f32.xlu0 %v703
        %v726 = vpop.xlane.xlu0 %725
        %727 = vadd.xlane.f32.xlu0 %v704
        %v728 = vpop.xlane.xlu0 %727
        %729 = vadd.xlane.f32.xlu0 %v705
        %v730 = vpop.xlane.xlu0 %729
        %731 = vadd.xlane.f32.xlu0 %v706
        %v732 = vpop.xlane.xlu0 %731
        %733 = vadd.xlane.f32.xlu0 %v707
        %v734 = vpop.xlane.xlu0 %733
        %735 = vadd.xlane.f32.xlu0 %v708
        %v736 = vpop.xlane.xlu0 %735
        %737 = vadd.xlane.f32.xlu0 %v709
        %v738 = vpop.xlane.xlu0 %737
        %739 = vadd.xlane.f32.xlu0 %v710
        %v740 = vpop.xlane.xlu0 %739
        %741 = vadd.xlane.f32.xlu0 %v711
        %v742 = vpop.xlane.xlu0 %741
        %743 = vadd.xlane.f32.xlu0 %v712
        %v744 = vpop.xlane.xlu0 %743
        %v745 = vadd.f32 %v714, %v716
        %v746 = vadd.f32 %v745, %v718
        %v747 = vadd.f32 %v746, %v720
        %v748 = vadd.f32 %v747, %v722
        %v749 = vadd.f32 %v748, %v724
        %v750 = vadd.f32 %v749, %v726
        %v751 = vadd.f32 %v750, %v728
        %v752 = vadd.f32 %v751, %v730
        %v753 = vadd.f32 %v752, %v732
        %v754 = vadd.f32 %v753, %v734
        %v755 = vadd.f32 %v754, %v736
        %v756 = vadd.f32 %v755, %v738
        %v757 = vadd.f32 %v756, %v740
        %v758 = vadd.f32 %v757, %v742
        %v759 = vadd.f32 %v758, %v744
        %v760 = vrot.slane %v759, 4
        %v761 = vadd.f32 %v759, %v760
        %v762 = vrot.slane %v761, 2
        %v763 = vadd.f32 %v761, %v762
        %v764 = vrot.slane %v763, 1
        %v765 = vadd.f32 %v763, %v764
        %v766 = vmul.f32 %v765, 0.06666667
        %v767 = vsel %vm681, -10.0, %v439
        %v768 = vsel %vm682, -10.0, %v444
        %v769 = vsel %vm683, -10.0, %v449
        %v770 = vsel %vm684, -10.0, %v454
        %v771 = vsel %vm685, -10.0, %v459
        %v772 = vsel %vm686, -10.0, %v464
        %v773 = vsel %vm687, -10.0, %v469
        %v774 = vsel %vm688, -10.0, %v474
        %v775 = vsel %vm689, -10.0, %v479
        %v776 = vsel %vm690, -10.0, %v484
        %v777 = vsel %vm691, -10.0, %v489
        %v778 = vsel %vm692, -10.0, %v494
        %v779 = vsel %vm693, -10.0, %v499
        %v780 = vsel %vm694, -10.0, %v504
        %v781 = vsel %vm695, -10.0, %v509
        %v782 = vsel %vm696, -10.0, %v514
        %v783 = vmul.f32 %v767, 0.06666667
        %v784 = vmul.f32 %v768, 0.06666667
        %v785 = vmul.f32 %v769, 0.06666667
        %v786 = vmul.f32 %v770, 0.06666667
        %v787 = vmul.f32 %v771, 0.06666667
        %v788 = vmul.f32 %v772, 0.06666667
        %v789 = vmul.f32 %v773, 0.06666667
        %v790 = vmul.f32 %v774, 0.06666667
        %v791 = vmul.f32 %v775, 0.06666667
        %v792 = vmul.f32 %v776, 0.06666667
        %v793 = vmul.f32 %v777, 0.06666667
        %v794 = vmul.f32 %v778, 0.06666667
        %v795 = vmul.f32 %v779, 0.06666667
        %v796 = vmul.f32 %v780, 0.06666667
        %v797 = vmul.f32 %v781, 0.06666667
        %v798 = vmul.f32 %v782, 0.06666667
        %v799 = vsel %vm681, -10.0, %v584
        %v800 = vsel %vm682, -10.0, %v589
        %v801 = vsel %vm683, -10.0, %v594
        %v802 = vsel %vm684, -10.0, %v599
        %v803 = vsel %vm685, -10.0, %v604
        %v804 = vsel %vm686, -10.0, %v609
        %v805 = vsel %vm687, -10.0, %v614
        %v806 = vsel %vm688, -10.0, %v619
        %v807 = vsel %vm689, -10.0, %v624
        %v808 = vsel %vm690, -10.0, %v629
        %v809 = vsel %vm691, -10.0, %v634
        %v810 = vsel %vm692, -10.0, %v639
        %v811 = vsel %vm693, -10.0, %v644
        %v812 = vsel %vm694, -10.0, %v649
        %v813 = vsel %vm695, -10.0, %v654
        %v814 = vsel %vm696, -10.0, %v659
        %v815 = vmul.f32 %v799, 0.06666667
        %v816 = vmul.f32 %v800, 0.06666667
        %v817 = vmul.f32 %v801, 0.06666667
        %v818 = vmul.f32 %v802, 0.06666667
        %v819 = vmul.f32 %v803, 0.06666667
        %v820 = vmul.f32 %v804, 0.06666667
        %v821 = vmul.f32 %v805, 0.06666667
        %v822 = vmul.f32 %v806, 0.06666667
        %v823 = vmul.f32 %v807, 0.06666667
        %v824 = vmul.f32 %v808, 0.06666667
        %v825 = vmul.f32 %v809, 0.06666667
        %v826 = vmul.f32 %v810, 0.06666667
        %v827 = vmul.f32 %v811, 0.06666667
        %v828 = vmul.f32 %v812, 0.06666667
        %v829 = vmul.f32 %v813, 0.06666667
        %v830 = vmul.f32 %v814, 0.06666667
        %v831 = vmax.f32 %v783, %v815
        %v832 = vmax.f32 %v784, %v816
        %v833 = vmax.f32 %v785, %v817
        %v834 = vmax.f32 %v786, %v818
        %v835 = vmax.f32 %v787, %v819
        %v836 = vmax.f32 %v788, %v820
        %v837 = vmax.f32 %v789, %v821
        %v838 = vmax.f32 %v790, %v822
        %v839 = vmax.f32 %v791, %v823
        %v840 = vmax.f32 %v792, %v824
        %v841 = vmax.f32 %v793, %v825
        %v842 = vmax.f32 %v794, %v826
        %v843 = vmax.f32 %v795, %v827
        %v844 = vmax.f32 %v796, %v828
        %v845 = vmax.f32 %v797, %v829
        %v846 = vmax.f32 %v798, %v830
        %847 = vmax.xlane.f32.xlu0 %v831
        %v848 = vpop.xlane.xlu0 %847
        %849 = vmax.xlane.f32.xlu0 %v832
        %v850 = vpop.xlane.xlu0 %849
        %851 = vmax.xlane.f32.xlu0 %v833
        %v852 = vpop.xlane.xlu0 %851
        %853 = vmax.xlane.f32.xlu0 %v834
        %v854 = vpop.xlane.xlu0 %853
        %855 = vmax.xlane.f32.xlu0 %v835
        %v856 = vpop.xlane.xlu0 %855
        %857 = vmax.xlane.f32.xlu0 %v836
        %v858 = vpop.xlane.xlu0 %857
        %859 = vmax.xlane.f32.xlu0 %v837
        %v860 = vpop.xlane.xlu0 %859
        %861 = vmax.xlane.f32.xlu0 %v838
        %v862 = vpop.xlane.xlu0 %861
        %863 = vmax.xlane.f32.xlu0 %v839
        %v864 = vpop.xlane.xlu0 %863
        %865 = vmax.xlane.f32.xlu0 %v840
        %v866 = vpop.xlane.xlu0 %865
        %867 = vmax.xlane.f32.xlu0 %v841
        %v868 = vpop.xlane.xlu0 %867
        %869 = vmax.xlane.f32.xlu0 %v842
        %v870 = vpop.xlane.xlu0 %869
        %871 = vmax.xlane.f32.xlu0 %v843
        %v872 = vpop.xlane.xlu0 %871
        %873 = vmax.xlane.f32.xlu0 %v844
        %v874 = vpop.xlane.xlu0 %873
        %875 = vmax.xlane.f32.xlu0 %v845
        %v876 = vpop.xlane.xlu0 %875
        %877 = vmax.xlane.f32.xlu0 %v846
        %v878 = vpop.xlane.xlu0 %877
        %v879 = vmax.f32 %v848, %v856
        %v880 = vmax.f32 %v850, %v858
        %v881 = vmax.f32 %v852, %v860
        %v882 = vmax.f32 %v854, %v862
        %v883 = vmax.f32 %v879, %v864
        %v884 = vmax.f32 %v880, %v866
        %v885 = vmax.f32 %v881, %v868
        %v886 = vmax.f32 %v882, %v870
        %v887 = vmax.f32 %v883, %v872
        %v888 = vmax.f32 %v884, %v874
        %v889 = vmax.f32 %v885, %v876
        %v890 = vmax.f32 %v886, %v878
        %v891 = vmax.f32 %v887, %v888
        %v892 = vmax.f32 %v889, %v890
        %v893 = vmax.f32 %v891, %v892
        %v894 = vrot.slane %v893, 4
        %v895 = vmax.f32 %v893, %v894
        %v896 = vrot.slane %v895, 2
        %v897 = vmax.f32 %v895, %v896
        %v898 = vrot.slane %v897, 1
        %v899 = vmax.f32 %v897, %v898
        %v900 = vmax.f32 %v899, %v766
        %v901 = vsub.f32 %v766, %v900
        %v902 = vmul.f32 %v901, 1.442695
        %v903 = vpow.pop %v902
        %v904 = vsub.f32 %v783, %v900
        %v905 = vsub.f32 %v784, %v900
        %v906 = vsub.f32 %v785, %v900
        %v907 = vsub.f32 %v786, %v900
        %v908 = vsub.f32 %v787, %v900
        %v909 = vsub.f32 %v788, %v900
        %v910 = vsub.f32 %v789, %v900
        %v911 = vsub.f32 %v790, %v900
        %v912 = vsub.f32 %v791, %v900
        %v913 = vsub.f32 %v792, %v900
        %v914 = vsub.f32 %v793, %v900
        %v915 = vsub.f32 %v794, %v900
        %v916 = vsub.f32 %v795, %v900
        %v917 = vsub.f32 %v796, %v900
        %v918 = vsub.f32 %v797, %v900
        %v919 = vsub.f32 %v798, %v900
        %v920 = vmul.f32 %v904, 1.442695
        %v921 = vpow.pop %v920
        %v922 = vmul.f32 %v905, 1.442695
        %v923 = vpow.pop %v922
        %v924 = vmul.f32 %v906, 1.442695
        %v925 = vpow.pop %v924
        %v926 = vmul.f32 %v907, 1.442695
        %v927 = vpow.pop %v926
        %v928 = vmul.f32 %v908, 1.442695
        %v929 = vpow.pop %v928
        %v930 = vmul.f32 %v909, 1.442695
        %v931 = vpow.pop %v930
        %v932 = vmul.f32 %v910, 1.442695
        %v933 = vpow.pop %v932
        %v934 = vmul.f32 %v911, 1.442695
        %v935 = vpow.pop %v934
        %v936 = vmul.f32 %v912, 1.442695
        %v937 = vpow.pop %v936
        %v938 = vmul.f32 %v913, 1.442695
        %v939 = vpow.pop %v938
        %v940 = vmul.f32 %v914, 1.442695
        %v941 = vpow.pop %v940
        %v942 = vmul.f32 %v915, 1.442695
        %v943 = vpow.pop %v942
        %v944 = vmul.f32 %v916, 1.442695
        %v945 = vpow.pop %v944
        %v946 = vmul.f32 %v917, 1.442695
        %v947 = vpow.pop %v946
        %v948 = vmul.f32 %v918, 1.442695
        %v949 = vpow.pop %v948
        %v950 = vmul.f32 %v919, 1.442695
        %v951 = vpow.pop %v950
        %v952 = vsub.f32 %v815, %v900
        %v953 = vsub.f32 %v816, %v900
        %v954 = vsub.f32 %v817, %v900
        %v955 = vsub.f32 %v818, %v900
        %v956 = vsub.f32 %v819, %v900
        %v957 = vsub.f32 %v820, %v900
        %v958 = vsub.f32 %v821, %v900
        %v959 = vsub.f32 %v822, %v900
        %v960 = vsub.f32 %v823, %v900
        %v961 = vsub.f32 %v824, %v900
        %v962 = vsub.f32 %v825, %v900
        %v963 = vsub.f32 %v826, %v900
        %v964 = vsub.f32 %v827, %v900
        %v965 = vsub.f32 %v828, %v900
        %v966 = vsub.f32 %v829, %v900
        %v967 = vsub.f32 %v830, %v900
        %v968 = vmul.f32 %v952, 1.442695
        %v969 = vpow.pop %v968
        %v970 = vmul.f32 %v953, 1.442695
        %v971 = vpow.pop %v970
        %v972 = vmul.f32 %v954, 1.442695
        %v973 = vpow.pop %v972
        %v974 = vmul.f32 %v955, 1.442695
        %v975 = vpow.pop %v974
        %v976 = vmul.f32 %v956, 1.442695
        %v977 = vpow.pop %v976
        %v978 = vmul.f32 %v957, 1.442695
        %v979 = vpow.pop %v978
        %v980 = vmul.f32 %v958, 1.442695
        %v981 = vpow.pop %v980
        %v982 = vmul.f32 %v959, 1.442695
        %v983 = vpow.pop %v982
        %v984 = vmul.f32 %v960, 1.442695
        %v985 = vpow.pop %v984
        %v986 = vmul.f32 %v961, 1.442695
        %v987 = vpow.pop %v986
        %v988 = vmul.f32 %v962, 1.442695
        %v989 = vpow.pop %v988
        %v990 = vmul.f32 %v963, 1.442695
        %v991 = vpow.pop %v990
        %v992 = vmul.f32 %v964, 1.442695
        %v993 = vpow.pop %v992
        %v994 = vmul.f32 %v965, 1.442695
        %v995 = vpow.pop %v994
        %v996 = vmul.f32 %v966, 1.442695
        %v997 = vpow.pop %v996
        %v998 = vmul.f32 %v967, 1.442695
        %v999 = vpow.pop %v998
        %v1000 = vadd.f32 %v921, %v969
        %v1001 = vadd.f32 %v923, %v971
        %v1002 = vadd.f32 %v925, %v973
        %v1003 = vadd.f32 %v927, %v975
        %v1004 = vadd.f32 %v929, %v977
        %v1005 = vadd.f32 %v931, %v979
        %v1006 = vadd.f32 %v933, %v981
        %v1007 = vadd.f32 %v935, %v983
        %v1008 = vadd.f32 %v937, %v985
        %v1009 = vadd.f32 %v939, %v987
        %v1010 = vadd.f32 %v941, %v989
        %v1011 = vadd.f32 %v943, %v991
        %v1012 = vadd.f32 %v945, %v993
        %v1013 = vadd.f32 %v947, %v995
        %v1014 = vadd.f32 %v949, %v997
        %v1015 = vadd.f32 %v951, %v999
        %1016 = vadd.xlane.f32.xlu0 %v1000
        %v1017 = vpop.xlane.xlu0 %1016
        %1018 = vadd.xlane.f32.xlu0 %v1001
        %v1019 = vpop.xlane.xlu0 %1018
        %1020 = vadd.xlane.f32.xlu0 %v1002
        %v1021 = vpop.xlane.xlu0 %1020
        %1022 = vadd.xlane.f32.xlu0 %v1003
        %v1023 = vpop.xlane.xlu0 %1022
        %1024 = vadd.xlane.f32.xlu0 %v1004
        %v1025 = vpop.xlane.xlu0 %1024
        %1026 = vadd.xlane.f32.xlu0 %v1005
        %v1027 = vpop.xlane.xlu0 %1026
        %1028 = vadd.xlane.f32.xlu0 %v1006
        %v1029 = vpop.xlane.xlu0 %1028
        %1030 = vadd.xlane.f32.xlu0 %v1007
        %v1031 = vpop.xlane.xlu0 %1030
        %1032 = vadd.xlane.f32.xlu0 %v1008
        %v1033 = vpop.xlane.xlu0 %1032
        %1034 = vadd.xlane.f32.xlu0 %v1009
        %v1035 = vpop.xlane.xlu0 %1034
        %1036 = vadd.xlane.f32.xlu0 %v1010
        %v1037 = vpop.xlane.xlu0 %1036
        %1038 = vadd.xlane.f32.xlu0 %v1011
        %v1039 = vpop.xlane.xlu0 %1038
        %1040 = vadd.xlane.f32.xlu0 %v1012
        %v1041 = vpop.xlane.xlu0 %1040
        %1042 = vadd.xlane.f32.xlu0 %v1013
        %v1043 = vpop.xlane.xlu0 %1042
        %1044 = vadd.xlane.f32.xlu0 %v1014
        %v1045 = vpop.xlane.xlu0 %1044
        %1046 = vadd.xlane.f32.xlu0 %v1015
        %v1047 = vpop.xlane.xlu0 %1046
        %v1048 = vadd.f32 %v1017, %v1019
        %v1049 = vadd.f32 %v1048, %v1021
        %v1050 = vadd.f32 %v1049, %v1023
        %v1051 = vadd.f32 %v1050, %v1025
        %v1052 = vadd.f32 %v1051, %v1027
        %v1053 = vadd.f32 %v1052, %v1029
        %v1054 = vadd.f32 %v1053, %v1031
        %v1055 = vadd.f32 %v1054, %v1033
        %v1056 = vadd.f32 %v1055, %v1035
        %v1057 = vadd.f32 %v1056, %v1037
        %v1058 = vadd.f32 %v1057, %v1039
        %v1059 = vadd.f32 %v1058, %v1041
        %v1060 = vadd.f32 %v1059, %v1043
        %v1061 = vadd.f32 %v1060, %v1045
        %v1062 = vadd.f32 %v1061, %v1047
        %v1063 = vrot.slane %v1062, 4
        %v1064 = vadd.f32 %v1062, %v1063
        %v1065 = vrot.slane %v1064, 2
        %v1066 = vadd.f32 %v1064, %v1065
        %v1067 = vrot.slane %v1066, 1
        %v1068 = vadd.f32 %v1066, %v1067
        %v1069 = vadd.f32 %v903, %v1068
        %v1070 = vlog2.pop %v1069
        %v1071 = vmul.f32 %v1070, 0.6931472
        %v1072 = vadd.f32 %v900, %v1071
        %v1073 = vsub.f32 %v1072, %v766
        %vm1074 = vcmask 0
        %1075 = vst.msk [vmem:[%s199] sm:$0x1] %vm1074, %v1073
        %p1076 = scmp.lt.s32.totalorder %s19, 1
        %s1077 = scalar_select %p1076, %s19, 1
        %s1078 = scalar_lea.vmem %s2, %s1077
        // Predicated region
        $region37: #{cvc_loss.1} parent=27 // pred_check
          %p1079 = pneg %p89
        $region38: #{cvc_loss.1} parent=27 // pred_check_branch
          %1081 = sbr.rel (%p1079) target = $region40
        $region39: #{cvc_loss.1} parent=27 // pred_region
          _
        $region40: #{cvc_loss.1} parent=27 // pred_fallthru
          _
      $region28: #{cvc_loss.1} parent=5 // pred_fallthru
        _
      %p1082 = scmp.le.s32.totalorder 2, %s14
      // Predicated region
      $region41: #{cvc_loss.1} parent=5 // pred_check
        %p1083 = pneg %p1082
      $region42: #{cvc_loss.1} parent=5 // pred_check_branch
        %1085 = sbr.rel (%p1083) target = $region44
      $region43: #{cvc_loss.1} parent=5 // pred_region
        %s1086 = ssub.s32 %s14, 2
        // Predicated region
        $region45: #{cvc_loss.1} parent=43 // pred_check
          %p1087 = pneg %p95
        $region46: #{cvc_loss.1} parent=43 // pred_check_branch
          %1089 = sbr.rel (%p1087) target = $region48
        $region47: #{cvc_loss.1} parent=43 // pred_region
          %p1090 = scmp.lt.s32.totalorder %s20, 1
          %s1091 = scalar_select %p1090, %s20, 1
          %s1092 = scalar_lea.vmem %s2, %s1091
        $region48: #{cvc_loss.1} parent=43 // pred_fallthru
          _
      $region44: #{cvc_loss.1} parent=5 // pred_fallthru
        _
    $region6: #{cvc_loss.1} parent=1 // loop_footer
      %s18 = sadd.s32 1, %s14
    $region7: #{cvc_loss.1} parent=1 // loop_footer_branch
      %13 = sbr.rel target = $region3
    $region8: #{cvc_loss.1} parent=1 // loop_exit
      _
    %1093 = vsyncpa [#allocation3], 1
    %s1094 = scalar_lea.sflag [#allocation3], 1
    %1095 = vsyncpa %s1094, 1
    %1096 = vsyncpa [#allocation5], 1
    %s1097 = scalar_lea.sflag [#allocation5], 1
    %1098 = vsyncpa %s1097, 1

</llo_original>
